<compile_context>
chip_gen: v5e
topology: v5e:2x2
jax: 0.10.0
libtpu: 0.0.40
codegen_flags: <defaults>
</compile_context>

<pallas_src>
import functools

import jax
import jax.numpy as jnp
from jax.experimental import pallas as pl
from jax.experimental.pallas import tpu as pltpu

# Scoped-VMEM budget kept at 32 MiB so the same kernels are safe on v7x's
# 64 MiB parts (was 48 MiB, sized for 128 MiB v5e/v6e parts).
VMEM_LIMIT = 32 * 1024 * 1024


def _round_up(x, m):
    return (x + m - 1) // m * m


# --------------------------------------------------------------------------
# Kernel 1: encoder projection  encp = enc @ w2   (row-tiled 2-D matmul)
# --------------------------------------------------------------------------
def _enc_proj_kernel(enc2d_ref, w2_ref, out_ref):
    out_ref[...] = jnp.dot(
        enc2d_ref[...], w2_ref[...],
        preferred_element_type=jnp.float32).astype(jnp.bfloat16)


# --------------------------------------------------------------------------
# Kernel 2: attention + LSTMCell (one decoder step, recurrent state update)
# --------------------------------------------------------------------------
def _atten_lstm_kernel(
    emb_ref,      # (tb, E)        f32  embedded next word
    hidden_ref,   # (tb, H)        f32
    cell_ref,     # (tb, H)        f32
    enc_ref,      # (tb, S, H)     bf16 encoder output
    encp_ref,     # (tb, S, Vp)    bf16 precomputed w2(encoder_output)
    w_hid_ref,    # (H, Vp+4H)     bf16 fused [w1_pad | w_hh]
    v_ref,        # (1, Vp)        f32  attention score vector (zero-padded)
    w_ih_ref,     # (E+H, 4H)      bf16 LSTM input-hidden weight (un-split)
    b_ref,        # (1, 4H)        f32  fused bias (b_ih + b_hh)
    h1_ref,       # (tb, H)        f32  out (aliases hidden)
    c1_ref,       # (tb, H)        f32  out (aliases cell)
    h1bf_ref,     # (tb, H)        bf16 out (feeds hidden2word directly)
):
    hidden = hidden_ref[...]
    cell = cell_ref[...]
    Vp = encp_ref.shape[-1]
    H = hidden.shape[-1]

    # ---- fused hidden matmul: hidden @ [w1_pad | w_hh] -> (tb, Vp + 4H) ----
    # Vp is a multiple of 128, so the split below is vreg-tile aligned.
    hid_proj = jnp.dot(hidden.astype(jnp.bfloat16), w_hid_ref[...],
                       preferred_element_type=jnp.float32)
    a1 = hid_proj[:, :Vp]          # attention proj of hidden
    hh_gates = hid_proj[:, Vp:]    # hidden-hidden gate contribution

    # ---- attention scores (bf16 loads, f32 math/accumulation) ----
    a3 = jnp.tanh(a1[:, None, :] + encp_ref[...])        # (tb, S, Vp) f32
    scores = jnp.sum(a3 * v_ref[...], axis=-1)           # (tb, S)
    scores = scores - jnp.max(scores, axis=-1, keepdims=True)
    e = jnp.exp(scores)
    # exact reciprocal: denominator is a (tb, 1) vector, exactness is free.
    aw = e / jnp.sum(e, axis=-1, keepdims=True)

    # ---- context: broadcast-multiply + cross-sublane reduce (VPU/XLU) ----
    ctx = jnp.sum(aw[:, :, None] * enc_ref[...], axis=1)  # (tb, H) f32

    # ---- LSTMCell (PyTorch gate order i, f, g, o) ----
    # Single input-side matmul with K = E + H instead of two short-K chains.
    x = jnp.concatenate(
        [emb_ref[...].astype(jnp.bfloat16), ctx.astype(jnp.bfloat16)], axis=1)
    gates = (jnp.dot(x, w_ih_ref[...], preferred_element_type=jnp.float32)
             + hh_gates + b_ref[...])                     # (tb, 4H)
    # TODO(synk): for production hidden sizes that are not multiples of 128,
    # pad the gate blocks at prepare time so these lane slices stay aligned.
    i_g = jax.nn.sigmoid(gates[:, 0 * H:1 * H])
    f_g = jax.nn.sigmoid(gates[:, 1 * H:2 * H])
    g_g = jnp.tanh(gates[:, 2 * H:3 * H])
    o_g = jax.nn.sigmoid(gates[:, 3 * H:4 * H])
    c1 = f_g * cell + i_g * g_g
    h1 = o_g * jnp.tanh(c1)

    h1_ref[...] = h1
    c1_ref[...] = c1
    h1bf_ref[...] = h1.astype(jnp.bfloat16)


# --------------------------------------------------------------------------
# Kernel 3: hidden2word, vocab-tiled output projection (weight stream)
# --------------------------------------------------------------------------
def _hidden2word_kernel(h1_ref, w_out_ref, b_out_ref, out_ref):
    out_ref[...] = (
        jnp.dot(h1_ref[...], w_out_ref[...], preferred_element_type=jnp.float32)
        + b_out_ref[...]
    )


# --------------------------------------------------------------------------
# Parameter init (mirrors the PyTorch module, weights pre-transposed to
# (in_features, out_features)) and one-time prep (bf16 cast, fusion, padding).
# --------------------------------------------------------------------------
def init_params(key, vocab, emb_dim, hidden_size):
    v_size = int(0.5 * hidden_size)
    ks = jax.random.split(key, 9)
    s = 0.1
    return {
        "embedding": s * jax.random.normal(ks[0], (vocab, emb_dim), jnp.float32),
        "w1": s * jax.random.normal(ks[1], (hidden_size, v_size), jnp.float32),
        "w2": s * jax.random.normal(ks[2], (hidden_size, v_size), jnp.float32),
        "v": s * jax.random.normal(ks[3], (1, v_size), jnp.float32),
        "w_ih": s * jax.random.normal(
            ks[4], (emb_dim + hidden_size, 4 * hidden_size), jnp.float32),
        "b_ih": s * jax.random.normal(ks[5], (1, 4 * hidden_size), jnp.float32),
        "w_hh": s * jax.random.normal(
            ks[6], (hidden_size, 4 * hidden_size), jnp.float32),
        "b_hh": s * jax.random.normal(ks[7], (1, 4 * hidden_size), jnp.float32),
        "w_out": s * jax.random.normal(ks[8], (hidden_size, vocab), jnp.float32),
        "b_out": jnp.zeros((1, vocab), jnp.float32),
    }


def prepare_params(params, *, tn=4096):
    """One-time prep: bf16 weight casts, matmul/bias fusion, lane padding.

    tn guidance: kernel 3 is a DMA-bound weight stream — use 4096-8192 on
    v5e/v6e (128 MiB VMEM); keep tn*H*2B per buffer well under the scoped
    budget on v7x (64 MiB physical), i.e. 2048-4096 for H <= 1024.
    """
    E = params["embedding"].shape[1]
    H = params["w_hh"].shape[0]
    V = params["w1"].shape[1]
    vocab = params["w_out"].shape[1]

    # Pad the attention dim V to a multiple of 128 so the hid_proj split and
    # the encp lane layout are vreg-tile aligned. Zero-padded w1/w2/v columns
    # contribute tanh(0)*0 = 0 to the scores, so this is exact.
    V_pad = _round_up(V, 128)
    w1 = jnp.pad(params["w1"], ((0, 0), (0, V_pad - V)))
    w2 = jnp.pad(params["w2"], ((0, 0), (0, V_pad - V)))
    v = jnp.pad(params["v"], ((0, 0), (0, V_pad - V)))

    # vocab tile: multiple of 128 (lane-dense output stores)
    tn = max(128, min(_round_up(tn, 128), _round_up(vocab, 128)))
    vocab_pad = _round_up(vocab, tn)
    w_out = params["w_out"]
    b_out = params["b_out"]
    if vocab_pad != vocab:
        w_out = jnp.pad(w_out, ((0, 0), (0, vocab_pad - vocab)))
        b_out = jnp.pad(b_out, ((0, 0), (0, vocab_pad - vocab)))

    prepped = {
        "embedding": params["embedding"],
        "w2": w2.astype(jnp.bfloat16),                              # (H, Vp)
        "w_hid": jnp.concatenate([w1, params["w_hh"]],
                                 axis=1).astype(jnp.bfloat16),      # (H, Vp+4H)
        "v": v,                                                     # (1, Vp) f32
        "w_ih": params["w_ih"].astype(jnp.bfloat16),                # (E+H, 4H)
        "b_gates": (params["b_ih"] + params["b_hh"]).astype(jnp.float32),
        "w_out": w_out.astype(jnp.bfloat16),                        # (H, vocab_pad)
        "b_out": b_out.astype(jnp.float32),                         # (1, vocab_pad)
    }
    meta = dict(E=E, H=H, V=V, V_pad=V_pad, vocab=vocab,
                vocab_pad=vocab_pad, tn=tn)
    return prepped, meta


# --------------------------------------------------------------------------
# Step-invariant encoder prep (hoisted out of the per-step decode path):
# bf16 cast of encoder_output + row-tiled projection enc @ w2 -> bf16 encp.
# --------------------------------------------------------------------------
def encode_source(prepped, encoder_output, *, meta):
    B, S, H = encoder_output.shape
    V_pad = meta["V_pad"]

    B_pad = _round_up(max(B, 8), 8)
    pb = B_pad - B
    enc_bf = encoder_output
    if pb:
        enc_bf = jnp.pad(enc_bf, ((0, pb), (0, 0), (0, 0)))
    enc_bf = enc_bf.astype(jnp.bfloat16)                   # (B_pad, S, H) bf16

    # Row-tiled matmul over M = B_pad * S (parallel grid, streamed tiles).
    M = B_pad * S
    tm = min(256, M)                                       # multiple of 8
    M_pad = _round_up(M, tm)
    enc2d = enc_bf.reshape(M, H)
    if M_pad != M:
        enc2d = jnp.pad(enc2d, ((0, M_pad - M), (0, 0)))

    enc_proj = pl.pallas_call(
        _enc_proj_kernel,
        out_shape=jax.ShapeDtypeStruct((M_pad, V_pad), jnp.bfloat16),
        grid_spec=pltpu.PrefetchScalarGridSpec(
            num_scalar_prefetch=0,
            grid=(M_pad // tm,),
            in_specs=[pl.BlockSpec((tm, H), lambda i: (i, 0)),
                      pl.BlockSpec((H, V_pad), lambda i: (0, 0))],
            out_specs=pl.BlockSpec((tm, V_pad), lambda i: (i, 0)),
        ),
        compiler_params=pltpu.CompilerParams(
            dimension_semantics=("parallel",),
            vmem_limit_bytes=VMEM_LIMIT),
    )(enc2d, prepped["w2"])
    enc_proj = enc_proj[:M].reshape(B_pad, S, V_pad)       # (B_pad, S, Vp) bf16
    return enc_bf, enc_proj


# --------------------------------------------------------------------------
# One decoder step (consumes the precomputed enc_bf / enc_proj).
# --------------------------------------------------------------------------
def attention_decoder_step(prepped, hidden, cell, nextword_id,
                           enc_bf, enc_proj, *, meta):
    B = hidden.shape[0]
    B_pad, S, H = enc_bf.shape
    E = meta["E"]
    V_pad = meta["V_pad"]
    vocab, vocab_pad, tn = meta["vocab"], meta["vocab_pad"], meta["tn"]

    # Embedding gather is glue, done in plain JAX.
    emb = prepped["embedding"][nextword_id]                # (B, E) f32

    pb = B_pad - B
    if pb:
        emb = jnp.pad(emb, ((0, pb), (0, 0)))
        hidden_p = jnp.pad(hidden, ((0, pb), (0, 0)))
        cell_p = jnp.pad(cell, ((0, pb), (0, 0)))
    else:
        hidden_p, cell_p = hidden, cell

    # ---- attention + LSTM cell: batch-tiled grid, resident weights ----
    tb = 16 if B_pad % 16 == 0 else 8
    h1, c1, h1_bf = pl.pallas_call(
        _atten_lstm_kernel,
        out_shape=(jax.ShapeDtypeStruct((B_pad, H), jnp.float32),
                   jax.ShapeDtypeStruct((B_pad, H), jnp.float32),
                   jax.ShapeDtypeStruct((B_pad, H), jnp.bfloat16)),
        grid_spec=pltpu.PrefetchScalarGridSpec(
            num_scalar_prefetch=0,
            grid=(B_pad // tb,),
            in_specs=[
                pl.BlockSpec((tb, E), lambda b: (b, 0)),
                pl.BlockSpec((tb, H), lambda b: (b, 0)),
                pl.BlockSpec((tb, H), lambda b: (b, 0)),
                pl.BlockSpec((tb, S, H), lambda b: (b, 0, 0)),
                pl.BlockSpec((tb, S, V_pad), lambda b: (b, 0, 0)),
                pl.BlockSpec((H, V_pad + 4 * H), lambda b: (0, 0)),
                pl.BlockSpec((1, V_pad), lambda b: (0, 0)),
                pl.BlockSpec((E + H, 4 * H), lambda b: (0, 0)),
                pl.BlockSpec((1, 4 * H), lambda b: (0, 0)),
            ],
            out_specs=(
                pl.BlockSpec((tb, H), lambda b: (b, 0)),
                pl.BlockSpec((tb, H), lambda b: (b, 0)),
                pl.BlockSpec((tb, H), lambda b: (b, 0)),
            ),
        ),
        input_output_aliases={1: 0, 2: 1},
        compiler_params=pltpu.CompilerParams(
            dimension_semantics=("parallel",),
            vmem_limit_bytes=VMEM_LIMIT),
    )(emb, hidden_p, cell_p, enc_bf, enc_proj,
      prepped["w_hid"], prepped["v"], prepped["w_ih"], prepped["b_gates"])

    # ---- hidden2word: vocab-tiled, weight stream double-buffered ----
    # TODO(synk): optionally pipeline_mode=pl.Buffered(3) on the w_out stream
    # once the per-generation VMEM budget is confirmed (small DMA-bubble win).
    logits = pl.pallas_call(
        _hidden2word_kernel,
        out_shape=jax.ShapeDtypeStruct((B_pad, vocab_pad), jnp.float32),
        grid_spec=pltpu.PrefetchScalarGridSpec(
            num_scalar_prefetch=0,
            grid=(vocab_pad // tn,),
            in_specs=[pl.BlockSpec((B_pad, H), lambda j: (0, 0)),
                      pl.BlockSpec((H, tn), lambda j: (0, j)),
                      pl.BlockSpec((1, tn), lambda j: (0, j))],
            out_specs=pl.BlockSpec((B_pad, tn), lambda j: (0, j)),
        ),
        compiler_params=pltpu.CompilerParams(
            dimension_semantics=("parallel",),
            vmem_limit_bytes=VMEM_LIMIT),
    )(h1_bf, prepped["w_out"], prepped["b_out"])

    return logits[:B, :vocab], h1[:B], c1[:B]


def attention_decoder_forward(prepped, hidden, cell, nextword_id,
                              encoder_output, *, meta):
    """Convenience single-step forward (projection + step in one call)."""
    enc_bf, enc_proj = encode_source(prepped, encoder_output, meta=meta)
    return attention_decoder_step(prepped, hidden, cell, nextword_id,
                                  enc_bf, enc_proj, meta=meta)


# --------------------------------------------------------------------------
# Pure-JAX f32 reference mirroring the PyTorch module.
# --------------------------------------------------------------------------
def reference_forward(params, hidden, cell, nextword_id, encoder_output):
    emb = params["embedding"][nextword_id]
    a1 = hidden @ params["w1"]
    a2 = jnp.einsum("bsh,hv->bsv", encoder_output, params["w2"])
    a3 = jnp.tanh(a1[:, None, :] + a2)
    scores = jnp.sum(a3 * params["v"], axis=-1)
    aw = jax.nn.softmax(scores, axis=-1)
    ctx = jnp.einsum("bs,bsh->bh", aw, encoder_output)
    x = jnp.concatenate([emb, ctx], axis=1)
    gates = (x @ params["w_ih"] + params["b_ih"]
             + hidden @ params["w_hh"] + params["b_hh"])
    H = hidden.shape[-1]
    i_g = jax.nn.sigmoid(gates[:, 0 * H:1 * H])
    f_g = jax.nn.sigmoid(gates[:, 1 * H:2 * H])
    g_g = jnp.tanh(gates[:, 2 * H:3 * H])
    o_g = jax.nn.sigmoid(gates[:, 3 * H:4 * H])
    c1 = f_g * cell + i_g * g_g
    h1 = o_g * jnp.tanh(c1)
    return h1 @ params["w_out"] + params["b_out"], h1, c1


if __name__ == "__main__":
    B, S = 2, 8
    HIDDEN = 32
    EMB = 32
    VOCAB = 256  # multiple of 128 so the logits tiles are lane-dense

    key = jax.random.PRNGKey(0)
    kp, kh, kc, ke, ki = jax.random.split(key, 5)

    params = init_params(kp, VOCAB, EMB, HIDDEN)
    hidden = jax.random.normal(kh, (B, HIDDEN), jnp.float32)
    cell = jax.random.normal(kc, (B, HIDDEN), jnp.float32)
    encoder_output = jax.random.normal(ke, (B, S, HIDDEN), jnp.float32)
    nextword_id = jax.random.randint(ki, (B,), 0, VOCAB, jnp.int32)

    # small tn so the toy vocab still exercises a multi-step grid (256 // 128 = 2)
    prepped, meta = prepare_params(params, tn=128)

    encode = jax.jit(functools.partial(encode_source, meta=meta))
    step = jax.jit(functools.partial(attention_decoder_step, meta=meta))

    # Step-invariant encoder projection is computed once per source sentence
    # (hoisted out of the decode loop), then a single decoder step runs.
    enc_bf, enc_proj = encode(prepped, encoder_output)
    out, h1, c1 = step(prepped, hidden, cell, nextword_id, enc_bf, enc_proj)
    jax.block_until_ready((out, h1, c1))

    ref_out, ref_h1, ref_c1 = reference_forward(
        params, hidden, cell, nextword_id, encoder_output)

    # bf16 matmul weights / bf16 enc,encp streams -> relaxed tolerance vs the
    # exact-f32 reference.
    assert out.shape == (B, VOCAB) and h1.shape == (B, HIDDEN)
    assert c1.shape == (B, HIDDEN)
    assert jnp.allclose(out, ref_out, atol=2e-2, rtol=2e-2)
    assert jnp.allclose(h1, ref_h1, atol=2e-2, rtol=2e-2)
    assert jnp.allclose(c1, ref_c1, atol=2e-2, rtol=2e-2)

    print("KERNEL_OK")
</pallas_src>

<mosaic_0001>
module attributes {stable_mosaic.version = 11 : i64} {
  func.func @_enc_proj_kernel(%arg0: i32, %arg1: memref<64x32xbf16, #tpu.memory_space<vmem>>, %arg2: memref<32x128xbf16, #tpu.memory_space<vmem>>, %arg3: memref<64x128xbf16, #tpu.memory_space<vmem>>) attributes {dimension_semantics = [#tpu.dimension_semantics<parallel>], iteration_bounds = array<i64: 1>, scalar_prefetch = 0 : i64, scratch_operands = 0 : i64, tpu.core_type = #tpu.core_type<tc>, window_params = [{transform_indices = @transform_0, window_bounds = array<i64: 64, 32>}, {pipeline_mode = #tpu.pipeline_mode<synchronous>, transform_indices = @transform_1, window_bounds = array<i64: 32, 128>}, {transform_indices = @transform_2, window_bounds = array<i64: 64, 128>}]} {
    %c0 = arith.constant 0 : index
    %c0_0 = arith.constant 0 : index
    %0 = vector.load %arg1[%c0, %c0_0] : memref<64x32xbf16, #tpu.memory_space<vmem>>, vector<64x32xbf16>
    %c0_1 = arith.constant 0 : index
    %c0_2 = arith.constant 0 : index
    %1 = vector.load %arg2[%c0_1, %c0_2] : memref<32x128xbf16, #tpu.memory_space<vmem>>, vector<32x128xbf16>
    %cst = arith.constant dense<0.000000e+00> : vector<64x128xf32>
    %2 = tpu.matmul %0, %1, %cst {dimension_numbers = #tpu.dot_dimension_numbers<[1], [0], [0], [1], [0, 0, 1, 1], [], []>} : vector<64x32xbf16>, vector<32x128xbf16>, vector<64x128xf32> -> vector<64x128xf32>
    %3 = arith.truncf %2 : vector<64x128xf32> to vector<64x128xbf16>
    %c0_3 = arith.constant 0 : index
    %c0_4 = arith.constant 0 : index
    %4 = vector.load %arg3[%c0_3, %c0_4] : memref<64x128xbf16, #tpu.memory_space<vmem>>, vector<64x128xbf16>
    tpu.vector_store %arg3[%c0_3, %c0_4], %3 {strides = array<i32>} : memref<64x128xbf16, #tpu.memory_space<vmem>>, vector<64x128xbf16>,
    return
  }
  func.func @transform_0(%arg0: i32) -> (i32, i32) {
    %c0_i32 = arith.constant 0 : i32
    %c0_i32_0 = arith.constant 0 : i32
    return %arg0, %c0_i32 : i32, i32
  }
  func.func @transform_1(%arg0: i32) -> (i32, i32) {
    %c0_i32 = arith.constant 0 : i32
    %c0_i32_0 = arith.constant 0 : i32
    %c0_i32_1 = arith.constant 0 : i32
    return %c0_i32, %c0_i32_0 : i32, i32
  }
  func.func @transform_2(%arg0: i32) -> (i32, i32) {
    %c0_i32 = arith.constant 0 : i32
    %c0_i32_0 = arith.constant 0 : i32
    return %arg0, %c0_i32 : i32, i32
  }
}

</mosaic_0001>

<llo_original>
// kernel: encode_source.1
$region0: #{encode_source.1}
  #allocation0 [shape = 'u32[]', space=smem, size = 0x4, offset = 0x4, fixed_abs, tag = 'smem constant byte address 0x4 - core index']
  #allocation1 [shape = 'u32[72,128]{1,0:T(1,128)}', space=vmem, size = 0x9000, scoped, tag = 'internal scratch']
  %s0 = inlined_call_operand.vmem [shape: bf16[64,32], index: 0, kind: input, shape index: {}]
  %s1 = inlined_call_operand.vmem [shape: bf16[32,128], index: 1, kind: input, shape index: {}]
  %s2 = inlined_call_operand.hbm [shape: bf16[64,128], index: 2, kind: output, shape index: {}]
  %s3 = sld [smem:[#allocation0]]
  $region18: #{encode_source.1} parent=0
    _
  %s5 = ssub.s32 1, %s3
  %s6 = scalar_select 0, %s5, %s3
  $region1: #{encode_source.1} parent=0
    #allocation2 [shape = 'u8[16384]{0}', space=vmem, size = 0x4000, scoped, tag = 'output window, operand 0, single buffered']
    #allocation3 [shape = 's32[1]{0}', space=sflag, size = 0x4, scoped, tag = 'scoped memory for encode_source.1']
    %7 = vsyncpa [#allocation3], 0
    // Predicated region
    $region2: #{encode_source.1} parent=1 // pred_check
      _
    $region3: #{encode_source.1} parent=1 // pred_check_branch
      %9 = sbr.rel (0) target = $region5
    $region4: #{encode_source.1} parent=1 // pred_region
      _
    $region5: #{encode_source.1} parent=1 // pred_fallthru
      _
    // Predicated region
    $region6: #{encode_source.1} parent=1 // pred_check
      _
    $region7: #{encode_source.1} parent=1 // pred_check_branch
      %11 = sbr.rel (0) target = $region9
    $region8: #{encode_source.1} parent=1 // pred_region
      _
    $region9: #{encode_source.1} parent=1 // pred_fallthru
      _
    %v13 = vld [vmem:[%s0] sm:$0xf]
    %v14 = vld [vmem:[%s0 + $0x4] sm:$0xf]
    %v15 = vld [vmem:[%s0 + $0x8] sm:$0xf]
    %v16 = vld [vmem:[%s0 + $0xc] sm:$0xf]
    %v17 = vld [vmem:[%s0 + $0x10] sm:$0xf]
    %v18 = vld [vmem:[%s0 + $0x14] sm:$0xf]
    %v19 = vld [vmem:[%s0 + $0x18] sm:$0xf]
    %v20 = vld [vmem:[%s0 + $0x1c] sm:$0xf]
    %v21 = vld [vmem:[%s1] sm:$0xf]
    %v22 = vld [vmem:[%s1 + $0x4] sm:$0xf]
    %v23 = vld [vmem:[%s1 + $0x8] sm:$0xf]
    %v24 = vld [vmem:[%s1 + $0xc] sm:$0xf]
    %v33 = vunpack.c.l.b16 %v13
    %v34 = vunpack.c.l.b16 %v14
    %v35 = vunpack.c.l.b16 %v15
    %v36 = vunpack.c.l.b16 %v16
    %v37 = vunpack.c.l.b16 %v17
    %v38 = vunpack.c.l.b16 %v18
    %v39 = vunpack.c.l.b16 %v19
    %v40 = vunpack.c.l.b16 %v20
    %v41 = vpack.c.b16 %v34, %v33
    %v42 = vpack.c.b16 %v36, %v35
    %v43 = vpack.c.b16 %v38, %v37
    %v44 = vpack.c.b16 %v40, %v39
    %v49 = vunpack.c.l.b16 %v21
    %v50 = vunpack.c.l.b16 %v22
    %v51 = vunpack.c.l.b16 %v23
    %v52 = vunpack.c.l.b16 %v24
    %v53 = vpack.c.b16 %v50, %v49
    %v54 = vpack.c.b16 %v52, %v51
    %vm57 = vcmask 261120
    %v59 = vsel %vm57, %v41, 0
    %v62 = vsel %vm57, %v42, 0
    %v65 = vsel %vm57, %v43, 0
    %v68 = vsel %vm57, %v44, 0
    %70 = vmatpush.bf16.msra.mxu0 0
    %71 = vmatpush.bf16.msra.mxu0 0
    %72 = vmatpush.bf16.msra.mxu0 0
    %73 = vmatpush.bf16.msra.mxu0 0
    %74 = vmatpush.bf16.msra.mxu0 0
    %75 = vmatpush.bf16.msra.mxu0 0
    %76 = vmatpush.bf16.msra.mxu0 %v54
    %77 = vmatpush.bf16.msra.mxu0 %v53
    %78 = vmatmul.bf16.gmra.mxu0 %v59
    %v79 = vpop.f32.mrf.mxu0
    %v80 = vadd.f32 0.0, %v79
    %v81 = vpop.f32.mrf.mxu0
    %v82 = vadd.f32 0.0, %v81
    %83 = vmatmul.bf16.gmra.mxu0 %v62
    %v84 = vpop.f32.mrf.mxu0
    %v85 = vadd.f32 0.0, %v84
    %v86 = vpop.f32.mrf.mxu0
    %v87 = vadd.f32 0.0, %v86
    %88 = vmatmul.bf16.gmra.mxu0 %v65
    %v89 = vpop.f32.mrf.mxu0
    %v90 = vadd.f32 0.0, %v89
    %v91 = vpop.f32.mrf.mxu0
    %v92 = vadd.f32 0.0, %v91
    %93 = vmatmul.bf16.gmra.mxu0 %v68
    %v94 = vpop.f32.mrf.mxu0
    %v95 = vadd.f32 0.0, %v94
    %v96 = vpop.f32.mrf.mxu0
    %v97 = vadd.f32 0.0, %v96
    %98 = vdwg.mxu0
    %v99 = vpack.c.bf16 %v80, %v80
    %v100 = vpack.c.bf16 %v82, %v82
    %v101 = vpack.c.bf16 %v85, %v85
    %v102 = vpack.c.bf16 %v87, %v87
    %v103 = vpack.c.bf16 %v90, %v90
    %v104 = vpack.c.bf16 %v92, %v92
    %v105 = vpack.c.bf16 %v95, %v95
    %v106 = vpack.c.bf16 %v97, %v97
    %107 = vst [vmem:[#allocation2] sm:$0xf] %v99
    %108 = vst [vmem:[#allocation2 + $0x4] sm:$0xf] %v100
    %109 = vst [vmem:[#allocation2 + $0x8] sm:$0xf] %v101
    %110 = vst [vmem:[#allocation2 + $0xc] sm:$0xf] %v102
    %111 = vst [vmem:[#allocation2 + $0x10] sm:$0xf] %v103
    %112 = vst [vmem:[#allocation2 + $0x14] sm:$0xf] %v104
    %113 = vst [vmem:[#allocation2 + $0x18] sm:$0xf] %v105
    %114 = vst [vmem:[#allocation2 + $0x1c] sm:$0xf] %v106
    // Predicated region
    $region10: #{encode_source.1} parent=1 // pred_check
      _
    $region11: #{encode_source.1} parent=1 // pred_check_branch
      %116 = sbr.rel (0) target = $region13
    $region12: #{encode_source.1} parent=1 // pred_region
      %118 = vsyncadd [#allocation3], 0
      %s119 = sshll.u32 [#allocation2], 4
      %s120 = int_to_ptr.vmem [resolvable:$true] %s119
      %s121 = sshll.u32 %s2, 4
      %s122 = int_to_ptr.hbm [resolvable:$true] %s121
      %127 = dma.vmem_to_hbm [thread:$0]  %s120, 512, %s122, [#allocation3], 64, 64, 4
    $region13: #{encode_source.1} parent=1 // pred_fallthru
      _
    // Predicated region
    $region14: #{encode_source.1} parent=1 // pred_check
      _
    $region15: #{encode_source.1} parent=1 // pred_check_branch
      %129 = sbr.rel (0) target = $region17
    $region16: #{encode_source.1} parent=1 // pred_region
      %131 = dma.done [#allocation3], 512
    $region17: #{encode_source.1} parent=1 // pred_fallthru
      _
    %132 = vsyncpa [#allocation3], 1

</llo_original>
